<compile_context>
chip_gen: v5e
topology: v5e:2x2
jax: 0.10.0
libtpu: 0.0.40
codegen_flags: <defaults>
</compile_context>

<pallas_src>
import jax
import jax.numpy as jnp
import numpy as np
from jax.experimental import pallas as pl
from jax.experimental.pallas import tpu as pltpu


def _sampler_kernel(z_ref, o_ref, d_ref, pts_ref):
    # z_ref:   (N, 1)        depths (resident, constant index_map).
    # o_ref:   (3, tR)       ray origins   (xyz on sublanes, rays on lanes).
    # d_ref:   (3, tR)       ray directions.
    # pts_ref: (3, N, tR)    sample points, lane-dense output tile.
    z = z_ref[...]                       # (N, 1)
    o = o_ref[...]                       # (3, tR)
    d = d_ref[...]                       # (3, tR)
    # (3, 1, tR) + (1, N, 1) * (3, 1, tR) -> (3, N, tR)
    pts_ref[...] = o[:, None, :] + z[None, :, :] * d[:, None, :]


def stratified_raysample(origins, directions, *, n_pts_per_ray, min_depth, max_depth,
                         ray_tile=512):
    """origins, directions: (R, 3) float32.

    Returns (sample_points (R, N, 3), sample_lengths (R, N, 1)) in the PyTorch layout.
    """
    R, C = origins.shape
    assert C == 3 and directions.shape == (R, 3)
    N = int(n_pts_per_ray)

    # Endpoint-exact linspace (matches torch.linspace), computed once on host side.
    z = jnp.linspace(float(min_depth), float(max_depth), N, dtype=jnp.float32)

    # Pad rays up to a multiple of ray_tile and put them on the (lane) last axis.
    r_pad = ((R + ray_tile - 1) // ray_tile) * ray_tile
    o_t = jnp.zeros((3, r_pad), jnp.float32).at[:, :R].set(origins.astype(jnp.float32).T)
    d_t = jnp.zeros((3, r_pad), jnp.float32).at[:, :R].set(directions.astype(jnp.float32).T)

    grid = (r_pad // ray_tile,)
    pts_t = pl.pallas_call(
        _sampler_kernel,
        out_shape=jax.ShapeDtypeStruct((3, N, r_pad), jnp.float32),
        grid_spec=pltpu.PrefetchScalarGridSpec(
            num_scalar_prefetch=0,
            grid=grid,
            in_specs=[
                pl.BlockSpec((N, 1), lambda i: (0, 0)),           # z: loaded once
                pl.BlockSpec((3, ray_tile), lambda i: (0, i)),    # origins tile
                pl.BlockSpec((3, ray_tile), lambda i: (0, i)),    # directions tile
            ],
            out_specs=pl.BlockSpec((3, N, ray_tile), lambda i: (0, 0, i)),
        ),
        compiler_params=pltpu.CompilerParams(
            dimension_semantics=("parallel",),   # shards grid steps across v7x's 2 TCs
        ),
    )(z.reshape(N, 1), o_t, d_t)

    # Layout plumbing back to the PyTorch convention.
    sample_points = jnp.transpose(pts_t, (2, 1, 0))[:R]                # (R, N, 3)
    sample_lengths = jnp.broadcast_to(z.reshape(1, N, 1), (R, N, 1))   # (R, N, 1)
    return sample_points, sample_lengths


if __name__ == "__main__":
    # Config (mirrors cfg.n_pts_per_ray / cfg.min_depth / cfg.max_depth).
    n_pts_per_ray = 16
    min_depth = 0.1
    max_depth = 4.0

    # Deterministic small inputs: 256 rays (2 grid steps at ray_tile=128).
    key = jax.random.PRNGKey(0)
    k_o, k_d = jax.random.split(key)
    R = 256
    origins = jax.random.normal(k_o, (R, 3), dtype=jnp.float32)
    directions = jax.random.normal(k_d, (R, 3), dtype=jnp.float32)
    directions = directions / jnp.linalg.norm(directions, axis=-1, keepdims=True)

    pts, lens = stratified_raysample(
        origins, directions,
        n_pts_per_ray=n_pts_per_ray, min_depth=min_depth, max_depth=max_depth,
        ray_tile=128,
    )
    pts = jax.block_until_ready(pts)
    lens = jax.block_until_ready(lens)

    # Pure-JAX reference (same formula as the PyTorch module).
    z_ref = jnp.linspace(min_depth, max_depth, n_pts_per_ray, dtype=jnp.float32).reshape(1, -1, 1)
    pts_ref = origins.reshape(-1, 1, 3) + z_ref * directions.reshape(-1, 1, 3)
    lens_ref = z_ref * jnp.ones_like(pts_ref[..., :1])

    assert pts.shape == (R, n_pts_per_ray, 3)
    assert lens.shape == (R, n_pts_per_ray, 1)
    np.testing.assert_allclose(np.asarray(pts), np.asarray(pts_ref), rtol=1e-6, atol=1e-6)
    np.testing.assert_allclose(np.asarray(lens), np.asarray(lens_ref), rtol=1e-6, atol=1e-6)

    print("KERNEL_OK")
</pallas_src>

<mosaic_0001>
module attributes {stable_mosaic.version = 11 : i64} {
  func.func @_sampler_kernel(%arg0: i32, %arg1: memref<16x1xf32, #tpu.memory_space<vmem>>, %arg2: memref<3x128xf32, #tpu.memory_space<vmem>>, %arg3: memref<3x128xf32, #tpu.memory_space<vmem>>, %arg4: memref<3x16x128xf32, #tpu.memory_space<vmem>>) attributes {dimension_semantics = [#tpu.dimension_semantics<parallel>], iteration_bounds = array<i64: 2>, scalar_prefetch = 0 : i64, scratch_operands = 0 : i64, tpu.core_type = #tpu.core_type<tc>, window_params = [{pipeline_mode = #tpu.pipeline_mode<synchronous>, transform_indices = @transform_0, window_bounds = array<i64: 16, 1>}, {transform_indices = @transform_1, window_bounds = array<i64: 3, 128>}, {transform_indices = @transform_2, window_bounds = array<i64: 3, 128>}, {transform_indices = @transform_3, window_bounds = array<i64: 3, 16, 128>}]} {
    %c0 = arith.constant 0 : index
    %c0_0 = arith.constant 0 : index
    %0 = vector.load %arg1[%c0, %c0_0] : memref<16x1xf32, #tpu.memory_space<vmem>>, vector<16x1xf32>
    %c0_1 = arith.constant 0 : index
    %c0_2 = arith.constant 0 : index
    %1 = vector.load %arg2[%c0_1, %c0_2] : memref<3x128xf32, #tpu.memory_space<vmem>>, vector<3x128xf32>
    %c0_3 = arith.constant 0 : index
    %c0_4 = arith.constant 0 : index
    %2 = vector.load %arg3[%c0_3, %c0_4] : memref<3x128xf32, #tpu.memory_space<vmem>>, vector<3x128xf32>
    %3 = vector.shape_cast %1 : vector<3x128xf32> to vector<3x1x128xf32>
    %4 = vector.shape_cast %0 : vector<16x1xf32> to vector<1x16x1xf32>
    %5 = vector.shape_cast %2 : vector<3x128xf32> to vector<3x1x128xf32>
    %6 = vector.broadcast %4 : vector<1x16x1xf32> to vector<3x16x128xf32>
    %7 = vector.broadcast %5 : vector<3x1x128xf32> to vector<3x16x128xf32>
    %8 = arith.mulf %6, %7 : vector<3x16x128xf32>
    %9 = vector.broadcast %3 : vector<3x1x128xf32> to vector<3x16x128xf32>
    %10 = arith.addf %9, %8 : vector<3x16x128xf32>
    %c0_5 = arith.constant 0 : index
    %c0_6 = arith.constant 0 : index
    %c0_7 = arith.constant 0 : index
    %11 = vector.load %arg4[%c0_5, %c0_6, %c0_7] : memref<3x16x128xf32, #tpu.memory_space<vmem>>, vector<3x16x128xf32>
    tpu.vector_store %arg4[%c0_5, %c0_6, %c0_7], %10 {strides = array<i32>} : memref<3x16x128xf32, #tpu.memory_space<vmem>>, vector<3x16x128xf32>,
    return
  }
  func.func @transform_0(%arg0: i32) -> (i32, i32) {
    %c0_i32 = arith.constant 0 : i32
    %c0_i32_0 = arith.constant 0 : i32
    %c0_i32_1 = arith.constant 0 : i32
    return %c0_i32, %c0_i32_0 : i32, i32
  }
  func.func @transform_1(%arg0: i32) -> (i32, i32) {
    %c0_i32 = arith.constant 0 : i32
    %c0_i32_0 = arith.constant 0 : i32
    return %c0_i32, %arg0 : i32, i32
  }
  func.func @transform_2(%arg0: i32) -> (i32, i32) {
    %c0_i32 = arith.constant 0 : i32
    %c0_i32_0 = arith.constant 0 : i32
    return %c0_i32, %arg0 : i32, i32
  }
  func.func @transform_3(%arg0: i32) -> (i32, i32, i32) {
    %c0_i32 = arith.constant 0 : i32
    %c0_i32_0 = arith.constant 0 : i32
    %c0_i32_1 = arith.constant 0 : i32
    return %c0_i32, %c0_i32_0, %arg0 : i32, i32, i32
  }
}

</mosaic_0001>

<llo_original>
// kernel: tpu_custom_call.1
$region0: #{tpu_custom_call.1}
  #allocation0 [shape = 'u32[]', space=smem, size = 0x4, offset = 0x4, fixed_abs, tag = 'smem constant byte address 0x4 - core index']
  #allocation1 [shape = 'u32[72,128]{1,0:T(1,128)}', space=vmem, size = 0x9000, scoped, tag = 'internal scratch']
  %s0 = inlined_call_operand.vmem [shape: f32[16,1], index: 0, kind: input, shape index: {}]
  %s1 = inlined_call_operand.vmem [shape: f32[3,256], index: 1, kind: input, shape index: {}]
  %s2 = inlined_call_operand.vmem [shape: f32[3,256], index: 2, kind: input, shape index: {}]
  %s3 = inlined_call_operand.hbm [shape: f32[3,16,256], index: 3, kind: output, shape index: {}]
  %s4 = sld [smem:[#allocation0]]
  $region45: #{tpu_custom_call.1} parent=0
    _
  %s6 = ssub.s32 1, %s4
  %s7 = scalar_select 0, %s6, %s4
  $region1: #{tpu_custom_call.1} parent=0
    #allocation2 [shape = 'u8[49152]{0}', space=vmem, size = 0xc000, scoped, tag = 'output window, operand 0']
    #allocation3 [shape = 's32[2]{0}', space=sflag, size = 0x8, scoped, tag = 'scoped memory for tpu_custom_call.1']
    %8 = vsyncpa [#allocation3], 0
    %s9 = scalar_lea.sflag [#allocation3], 1
    %10 = vsyncpa %s9, 0
    loop: start=0, step=1, limit=4
    $region2: #{tpu_custom_call.1} parent=1 // loop_pre_header
      _
    $region3: #{tpu_custom_call.1} parent=1 // loop_header
      %s12 = sphi 0, %s16
      %p13 = scmp.ge.s32.totalorder %s12, 4
      %s20 = sphi 0, %s20
      %s22 = sphi 0, %s20
      %s23 = sphi 0, %s22
      %s37 = sphi 0, %s23
      %s43 = sphi 0, %s45
      %s46 = sphi 0, %s43
      %s47 = sphi 0, %s46
      %s63 = sphi 0, %s47
      %s69 = sphi 0, %s71
      %s72 = sphi 0, %s69
      %s73 = sphi 0, %s72
      %s89 = sphi 0, %s73
      %s95 = sphi 0, %s97
      %s98 = sphi 0, %s95
      %s99 = sphi 0, %s98
      %s115 = sphi 0, %s99
    $region4: #{tpu_custom_call.1} parent=1 // loop_header_branch
      %15 = sbr.rel (%p13) target = $region8
    $region5: #{tpu_custom_call.1} parent=1 // loop_body
      %s17 = ssub.s32 %s12, 1
      %s18 = ssub.s32 %s12, 2
      %s19 = sadd.s32 %s12, 1
      %s21 = sadd.s32 %s20, 1
      %p24 = scmp.eq.s32.totalorder %s12, 1
      %p25 = scmp.ne.s32.totalorder %s20, %s22
      %p26 = scmp.eq.s32.totalorder %s12, 0
      %p27 = por %p25, %p26
      %p28 = scmp.ne.s32.totalorder %s20, %s22
      %p29 = scmp.eq.s32.totalorder %s17, 1
      %p30 = por %p28, %p29
      %p31 = scmp.ne.s32.totalorder %s22, %s23
      %p32 = scmp.eq.s32.totalorder %s17, 0
      %p33 = por %p31, %p32
      %p34 = scmp.ne.s32.totalorder %s22, %s23
      %p35 = scmp.eq.s32.totalorder %s18, 1
      %p36 = por %p34, %p35
      %p38 = scmp.ne.s32.totalorder %s23, %s37
      %p39 = scmp.eq.s32.totalorder %s18, 0
      %p40 = por %p38, %p39
      %s41 = ssub.s32 %s12, %s19
      %p42 = scmp.eq.s32.totalorder %s41, 0
      %s44 = sadd.s32 %s43, 1
      %s45 = scalar_select %p42, %s43, %s44
      %p48 = pneg %p42
      %p49 = scmp.eq.s32.totalorder %s12, 1
      %p50 = por %p48, %p49
      %p51 = scmp.ne.s32.totalorder %s43, %s46
      %p52 = scmp.eq.s32.totalorder %s12, 0
      %p53 = por %p51, %p52
      %p54 = scmp.ne.s32.totalorder %s43, %s46
      %p55 = scmp.eq.s32.totalorder %s17, 1
      %p56 = por %p54, %p55
      %p57 = scmp.ne.s32.totalorder %s46, %s47
      %p58 = scmp.eq.s32.totalorder %s17, 0
      %p59 = por %p57, %p58
      %p60 = scmp.ne.s32.totalorder %s46, %s47
      %p61 = scmp.eq.s32.totalorder %s18, 1
      %p62 = por %p60, %p61
      %p64 = scmp.ne.s32.totalorder %s47, %s63
      %p65 = scmp.eq.s32.totalorder %s18, 0
      %p66 = por %p64, %p65
      %s67 = ssub.s32 %s12, %s19
      %p68 = scmp.eq.s32.totalorder %s67, 0
      %s70 = sadd.s32 %s69, 1
      %s71 = scalar_select %p68, %s69, %s70
      %p74 = pneg %p68
      %p75 = scmp.eq.s32.totalorder %s12, 1
      %p76 = por %p74, %p75
      %p77 = scmp.ne.s32.totalorder %s69, %s72
      %p78 = scmp.eq.s32.totalorder %s12, 0
      %p79 = por %p77, %p78
      %p80 = scmp.ne.s32.totalorder %s69, %s72
      %p81 = scmp.eq.s32.totalorder %s17, 1
      %p82 = por %p80, %p81
      %p83 = scmp.ne.s32.totalorder %s72, %s73
      %p84 = scmp.eq.s32.totalorder %s17, 0
      %p85 = por %p83, %p84
      %p86 = scmp.ne.s32.totalorder %s72, %s73
      %p87 = scmp.eq.s32.totalorder %s18, 1
      %p88 = por %p86, %p87
      %p90 = scmp.ne.s32.totalorder %s73, %s89
      %p91 = scmp.eq.s32.totalorder %s18, 0
      %p92 = por %p90, %p91
      %s93 = ssub.s32 %s12, %s19
      %p94 = scmp.eq.s32.totalorder %s93, 0
      %s96 = sadd.s32 %s95, 1
      %s97 = scalar_select %p94, %s95, %s96
      %p100 = pneg %p94
      %p101 = scmp.eq.s32.totalorder %s12, 1
      %p102 = por %p100, %p101
      %p103 = scmp.ne.s32.totalorder %s95, %s98
      %p104 = scmp.eq.s32.totalorder %s12, 0
      %p105 = por %p103, %p104
      %p106 = scmp.ne.s32.totalorder %s95, %s98
      %p107 = scmp.eq.s32.totalorder %s17, 1
      %p108 = por %p106, %p107
      %p109 = scmp.ne.s32.totalorder %s98, %s99
      %p110 = scmp.eq.s32.totalorder %s17, 0
      %p111 = por %p109, %p110
      %p112 = scmp.ne.s32.totalorder %s98, %s99
      %p113 = scmp.eq.s32.totalorder %s18, 1
      %p114 = por %p112, %p113
      %p116 = scmp.ne.s32.totalorder %s99, %s115
      %p117 = scmp.eq.s32.totalorder %s18, 0
      %p118 = por %p116, %p117
      %p119 = scmp.le.s32.totalorder 1, %s12
      %p120 = scmp.lt.s32.totalorder %s12, 3
      %p121 = pnand %p119, %p120
      %p122 = pneg %p121
      // Predicated region
      $region9: #{tpu_custom_call.1} parent=5 // pred_check
        _
      $region10: #{tpu_custom_call.1} parent=5 // pred_check_branch
        %124 = sbr.rel (%p121) target = $region12
      $region11: #{tpu_custom_call.1} parent=5 // pred_region
        %s125 = ssub.s32 %s12, 1
        // Predicated region
        $region13: #{tpu_custom_call.1} parent=11 // pred_check
          %p126 = pneg %p33
        $region14: #{tpu_custom_call.1} parent=11 // pred_check_branch
          %128 = sbr.rel (%p126) target = $region16
        $region15: #{tpu_custom_call.1} parent=11 // pred_region
          _
        $region16: #{tpu_custom_call.1} parent=11 // pred_fallthru
          _
      $region12: #{tpu_custom_call.1} parent=5 // pred_fallthru
        _
      %p129 = scmp.lt.s32.totalorder %s12, 2
      // Predicated region
      $region17: #{tpu_custom_call.1} parent=5 // pred_check
        %p130 = pneg %p129
      $region18: #{tpu_custom_call.1} parent=5 // pred_check_branch
        %132 = sbr.rel (%p130) target = $region20
      $region19: #{tpu_custom_call.1} parent=5 // pred_region
        // Predicated region
        $region21: #{tpu_custom_call.1} parent=19 // pred_check
          %p133 = pneg %p53
        $region22: #{tpu_custom_call.1} parent=19 // pred_check_branch
          %135 = sbr.rel (%p133) target = $region24
        $region23: #{tpu_custom_call.1} parent=19 // pred_region
          %p136 = scmp.lt.s32.totalorder %s12, 1
          %s137 = scalar_select %p136, %s12, 1
          %s138 = smul.addr %s137, 4
          %s139 = scalar_lea.vmem %s1, %s138
        $region24: #{tpu_custom_call.1} parent=19 // pred_fallthru
          _
        // Predicated region
        $region25: #{tpu_custom_call.1} parent=19 // pred_check
          %p140 = pneg %p79
        $region26: #{tpu_custom_call.1} parent=19 // pred_check_branch
          %142 = sbr.rel (%p140) target = $region28
        $region27: #{tpu_custom_call.1} parent=19 // pred_region
          %p143 = scmp.lt.s32.totalorder %s12, 1
          %s144 = scalar_select %p143, %s12, 1
          %s145 = smul.addr %s144, 4
          %s146 = scalar_lea.vmem %s2, %s145
        $region28: #{tpu_custom_call.1} parent=19 // pred_fallthru
          _
      $region20: #{tpu_custom_call.1} parent=5 // pred_fallthru
        _
      %p147 = scmp.le.s32.totalorder 1, %s12
      %p148 = scmp.lt.s32.totalorder %s12, 3
      %p149 = pnand %p147, %p148
      %p150 = pneg %p149
      // Predicated region
      $region29: #{tpu_custom_call.1} parent=5 // pred_check
        _
      $region30: #{tpu_custom_call.1} parent=5 // pred_check_branch
        %152 = sbr.rel (%p149) target = $region32
      $region31: #{tpu_custom_call.1} parent=5 // pred_region
        %s153 = ssub.s32 %s12, 1
        %p154 = pneg %p33
        %p155 = pneg %p30
        %p156 = scmp.lt.s32.totalorder %s17, 1
        %s157 = scalar_select %p156, %s17, 1
        %s158 = smul.addr %s157, 4
        %s159 = scalar_lea.vmem %s1, %s158
        %p160 = pneg %p59
        %p161 = pneg %p56
        %p162 = scmp.lt.s32.totalorder %s17, 1
        %s163 = scalar_select %p162, %s17, 1
        %s164 = smul.addr %s163, 4
        %s165 = scalar_lea.vmem %s2, %s164
        %p166 = pneg %p85
        %p167 = pneg %p82
        %p168 = pneg %p111
        %p169 = pneg %p108
        %s170 = sand.u32 %s98, 1
        %s171 = scalar_lea.sflag [#allocation3], %s170
        %s172 = sand.u32 %s98, 1
        %s173 = smul.addr %s172, 48
        %s174 = scalar_lea.vmem [#allocation2], %s173
        %p175 = scmp.lt.s32.totalorder %s17, 1
        %s176 = scalar_select %p175, %s17, 1
        %s177 = smul.addr %s176, 4
        %s178 = scalar_lea.vmem %s1, %s177
        %p179 = scmp.lt.s32.totalorder %s17, 1
        %s180 = scalar_select %p179, %s17, 1
        %s181 = smul.addr %s180, 4
        %s182 = scalar_lea.vmem %s2, %s181
        %v183 = vld [vmem:[%s0] sm:$0xff]
        %v184 = vld [vmem:[%s0 + $0x8] sm:$0xff]
        %v185 = vld [vmem:[%s178] sm:$0x7]
        %v186 = vld [vmem:[%s182] sm:$0x7]
        %v188 = vrot.slane %v185, 1
        %v189 = vrot.slane %v185, 2
        %v191 = vrot.slane %v186, 1
        %v192 = vrot.slane %v186, 2
        %194 = vset.pattern.permute.xlu0 0
        %195 = vperm.xlu0 %194, %v183
        %v196 = vpop.permute.xlu0 %195
        %199 = vset.pattern.permute.xlu0 0
        %200 = vperm.xlu0 %199, %v184
        %v201 = vpop.permute.xlu0 %200
        %v203 = vperm.slane %v186, 0
        %v204 = vperm.slane %v191, 0
        %v205 = vperm.slane %v192, 0
        %v209 = vmul.f32 %v196, %v203
        %v210 = vmul.f32 %v201, %v203
        %v211 = vmul.f32 %v196, %v204
        %v212 = vmul.f32 %v201, %v204
        %v213 = vmul.f32 %v196, %v205
        %v214 = vmul.f32 %v201, %v205
        %v215 = vperm.slane %v185, 0
        %v216 = vperm.slane %v188, 0
        %v217 = vperm.slane %v189, 0
        %v221 = vadd.f32 %v215, %v209
        %v222 = vadd.f32 %v215, %v210
        %v223 = vadd.f32 %v216, %v211
        %v224 = vadd.f32 %v216, %v212
        %v225 = vadd.f32 %v217, %v213
        %v226 = vadd.f32 %v217, %v214
        %227 = vst [vmem:[%s174] sm:$0xff] %v221
        %228 = vst [vmem:[%s174 + $0x8] sm:$0xff] %v222
        %229 = vst [vmem:[%s174 + $0x10] sm:$0xff] %v223
        %230 = vst [vmem:[%s174 + $0x18] sm:$0xff] %v224
        %231 = vst [vmem:[%s174 + $0x20] sm:$0xff] %v225
        %232 = vst [vmem:[%s174 + $0x28] sm:$0xff] %v226
        %s233 = sand.u32 %s98, 1
        %s234 = scalar_lea.sflag [#allocation3], %s233
        %s235 = sand.u32 %s98, 1
        %s236 = smul.addr %s235, 48
        %s237 = scalar_lea.vmem [#allocation2], %s236
        // Predicated region
        $region33: #{tpu_custom_call.1} parent=31 // pred_check
          %p238 = pneg %p108
        $region34: #{tpu_custom_call.1} parent=31 // pred_check_branch
          %240 = sbr.rel (%p238) target = $region36
        $region35: #{tpu_custom_call.1} parent=31 // pred_region
          %242 = vsyncadd %s234, 0
          %s243 = smul.addr %s17, 8
          %s244 = scalar_lea.hbm %s3, %s243
          %s245 = sshll.u32 %s237, 4
          %s246 = int_to_ptr.vmem [resolvable:$true] %s245
          %s247 = sshll.u32 %s244, 4
          %s248 = int_to_ptr.hbm [resolvable:$true] %s247
          %253 = dma.vmem_to_hbm [thread:$0]  %s246, 768, %s248, %s234, 128, 256, 8
        $region36: #{tpu_custom_call.1} parent=31 // pred_fallthru
          _
      $region32: #{tpu_custom_call.1} parent=5 // pred_fallthru
        _
      %p254 = scmp.le.s32.totalorder 2, %s12
      // Predicated region
      $region37: #{tpu_custom_call.1} parent=5 // pred_check
        %p255 = pneg %p254
      $region38: #{tpu_custom_call.1} parent=5 // pred_check_branch
        %257 = sbr.rel (%p255) target = $region40
      $region39: #{tpu_custom_call.1} parent=5 // pred_region
        %s258 = ssub.s32 %s12, 2
        // Predicated region
        $region41: #{tpu_custom_call.1} parent=39 // pred_check
          %p259 = pneg %p114
        $region42: #{tpu_custom_call.1} parent=39 // pred_check_branch
          %261 = sbr.rel (%p259) target = $region44
        $region43: #{tpu_custom_call.1} parent=39 // pred_region
          %s262 = sand.u32 %s99, 1
          %s263 = scalar_lea.sflag [#allocation3], %s262
          %s264 = sand.u32 %s99, 1
          %s265 = smul.addr %s264, 48
          %s266 = scalar_lea.vmem [#allocation2], %s265
          %268 = dma.done %s263, 768
        $region44: #{tpu_custom_call.1} parent=39 // pred_fallthru
          _
      $region40: #{tpu_custom_call.1} parent=5 // pred_fallthru
        _
    $region6: #{tpu_custom_call.1} parent=1 // loop_footer
      %s16 = sadd.s32 1, %s12
    $region7: #{tpu_custom_call.1} parent=1 // loop_footer_branch
      %11 = sbr.rel target = $region3
    $region8: #{tpu_custom_call.1} parent=1 // loop_exit
      _
    %269 = vsyncpa [#allocation3], 1
    %s270 = scalar_lea.sflag [#allocation3], 1
    %271 = vsyncpa %s270, 1

</llo_original>
